<compile_context>
chip_gen: v7x
topology: tpu7x:2x2x1
jax: 0.10.0
libtpu: 0.0.40
codegen_flags: <defaults>
</compile_context>

<pallas_src>
import functools

import jax
import jax.numpy as jnp
from jax.experimental import pallas as pl

HIDDEN = 256
PAD = 128            # lane-dense padded width for the action head
NEG = -1e30          # "minus infinity" for masking padded action columns


def _mlp_logits(x_ref, w1_ref, w23_ref, b_ref):
    """fc1 -> relu -> fc2 -> relu -> fc3 (bf16 MXU inputs, f32 accumulation)."""
    x = x_ref[...].astype(jnp.bfloat16)                          # in-kernel cast
    h1 = jnp.dot(x, w1_ref[...], preferred_element_type=jnp.float32)
    h1 = jnp.maximum(h1 + b_ref[:, 0:HIDDEN], 0.0)
    h2 = jnp.dot(h1.astype(jnp.bfloat16), w23_ref[:, 0:HIDDEN],
                 preferred_element_type=jnp.float32)
    h2 = jnp.maximum(h2 + b_ref[:, HIDDEN:2 * HIDDEN], 0.0)
    logits = jnp.dot(h2.astype(jnp.bfloat16), w23_ref[:, HIDDEN:HIDDEN + PAD],
                     preferred_element_type=jnp.float32)
    return logits + b_ref[:, 2 * HIDDEN:2 * HIDDEN + PAD]        # f32 (B, PAD)


def actor_forward_kernel(x_ref, w1_ref, w23_ref, b_ref, logits_ref):
    logits_ref[...] = _mlp_logits(x_ref, w1_ref, w23_ref, b_ref)


def actor_get_action_kernel(n_actions, x_ref, w1_ref, w23_ref, b_ref, g_ref,
                            logp_ref, probs_ref, act_ref):
    """Fused forward + log_softmax + probs + Gumbel-max Categorical sample."""
    logits = _mlp_logits(x_ref, w1_ref, w23_ref, b_ref)
    B, padw = logits.shape

    col = jax.lax.broadcasted_iota(jnp.int32, (B, padw), 1)
    valid = col < n_actions
    masked = jnp.where(valid, logits, NEG)                       # kill padded lanes

    # log_softmax / probs over the valid columns only.
    m = jnp.max(masked, axis=-1, keepdims=True)
    shifted = masked - m
    sumexp = jnp.sum(jnp.exp(shifted), axis=-1, keepdims=True)
    logp = shifted - jnp.log(sumexp)
    probs = jnp.exp(logp)                                        # padded cols -> 0

    # Categorical sampling via Gumbel-max (noise supplied by the caller).
    z = jnp.where(valid, masked + g_ref[...], NEG)
    zmax = jnp.max(z, axis=-1, keepdims=True)
    colf = col.astype(jnp.float32)
    act_f = jnp.min(jnp.where(z == zmax, colf, jnp.float32(padw)),
                    axis=-1, keepdims=True)                      # argmax (min index)

    logp_ref[...] = logp
    probs_ref[...] = probs
    act_ref[...] = act_f.astype(jnp.int32)


def _full(a):
    return pl.BlockSpec(a.shape, lambda: (0,) * a.ndim)


def init_actor_params(key, obs_dim, n_actions, hidden=HIDDEN):
    """PyTorch-style nn.Linear init (uniform +/- 1/sqrt(fan_in)), f32, (in,out)."""
    def linear(k, fan_in, fan_out):
        kw, kb = jax.random.split(k)
        bound = 1.0 / jnp.sqrt(jnp.float32(fan_in))
        w = jax.random.uniform(kw, (fan_in, fan_out), jnp.float32, -bound, bound)
        b = jax.random.uniform(kb, (1, fan_out), jnp.float32, -bound, bound)
        return w, b

    k1, k2, k3 = jax.random.split(key, 3)
    w1, b1 = linear(k1, obs_dim, hidden)
    w2, b2 = linear(k2, hidden, hidden)
    w3, b3 = linear(k3, hidden, n_actions)
    return (w1, b1, w2, b2, w3, b3)


def prepare_params(raw_params, n_actions, pad=PAD):
    """Zero-pad the action head to `pad` lanes, pack arrays, cast weights bf16."""
    w1, b1, w2, b2, w3, b3 = raw_params
    w3p = jnp.zeros((w3.shape[0], pad), jnp.float32).at[:, :n_actions].set(w3)
    b3p = jnp.zeros((1, pad), jnp.float32).at[:, :n_actions].set(b3)
    w23 = jnp.concatenate([w2, w3p], axis=1).astype(jnp.bfloat16)       # (256, 384)
    biases = jnp.concatenate([b1, b2, b3p], axis=1).astype(jnp.float32)  # (1, 640)
    return (w1.astype(jnp.bfloat16), w23, biases)


@functools.partial(jax.jit, static_argnums=(2,))
def actor_forward(x, prepared_params, n_actions):
    """Actor.forward: returns logits (B, n_actions)."""
    w1, w23, biases = prepared_params
    B = x.shape[0]
    logits_padded = pl.pallas_call(
        actor_forward_kernel,
        out_shape=jax.ShapeDtypeStruct((B, PAD), jnp.float32),
        grid=(),
        in_specs=[_full(x), _full(w1), _full(w23), _full(biases)],
        out_specs=pl.BlockSpec((B, PAD), lambda: (0, 0)),
    )(x, w1, w23, biases)
    return logits_padded[:, :n_actions]


@functools.partial(jax.jit, static_argnums=(2,))
def actor_get_action(x, prepared_params, n_actions, key):
    """Actor.get_action: (action, log_prob, action_probs), fused on-chip."""
    w1, w23, biases = prepared_params
    B = x.shape[0]
    gumbel = jax.random.gumbel(key, (B, PAD), jnp.float32)
    kernel = functools.partial(actor_get_action_kernel, n_actions)
    logp_p, probs_p, act = pl.pallas_call(
        kernel,
        out_shape=(
            jax.ShapeDtypeStruct((B, PAD), jnp.float32),   # log_softmax (padded)
            jax.ShapeDtypeStruct((B, PAD), jnp.float32),   # probs (padded)
            jax.ShapeDtypeStruct((B, 1), jnp.int32),       # sampled action
        ),
        grid=(),
        in_specs=[_full(x), _full(w1), _full(w23), _full(biases), _full(gumbel)],
        out_specs=(
            pl.BlockSpec((B, PAD), lambda: (0, 0)),
            pl.BlockSpec((B, PAD), lambda: (0, 0)),
            pl.BlockSpec((B, 1), lambda: (0, 0)),
        ),
    )(x, w1, w23, biases, gumbel)
    return act[:, 0], logp_p[:, :n_actions], probs_p[:, :n_actions]


def reference_forward(x, raw_params, n_actions):
    """Plain-JAX reference mirroring the kernel's bf16-in / f32-accum math."""
    w1, b1, w2, b2, w3, b3 = raw_params
    q = lambda a: a.astype(jnp.bfloat16).astype(jnp.float32)
    h1 = jnp.maximum(q(x) @ q(w1) + b1, 0.0)
    h2 = jnp.maximum(q(h1) @ q(w2) + b2, 0.0)
    logits = q(h2) @ q(w3) + b3
    return logits[:, :n_actions]


if __name__ == "__main__":
    key = jax.random.PRNGKey(0)
    k_params, k_x, k_sample = jax.random.split(key, 3)

    # flattened obs -> 256 -> 256 -> n_actions
    batch = 8
    obs_dim = 16      # np.prod(single_observation_space.shape)
    n_actions = 6     # single_action_space.n

    raw_params = init_actor_params(k_params, obs_dim, n_actions)
    params = prepare_params(raw_params, n_actions)
    x = jax.random.normal(k_x, (batch, obs_dim), dtype=jnp.float32)

    # forward (logits)
    logits = actor_forward(x, params, n_actions)
    jax.block_until_ready(logits)
    ref = reference_forward(x, raw_params, n_actions)
    assert logits.shape == (batch, n_actions)
    assert jnp.allclose(logits, ref, atol=2e-2, rtol=2e-2), \
        float(jnp.max(jnp.abs(logits - ref)))

    # fused get_action (sample, log_softmax, probs)
    action, log_prob, action_probs = actor_get_action(x, params, n_actions,
                                                      k_sample)
    jax.block_until_ready(action)
    ref_logp = jax.nn.log_softmax(ref, axis=-1)
    assert log_prob.shape == (batch, n_actions)
    assert action_probs.shape == (batch, n_actions)
    assert jnp.allclose(log_prob, ref_logp, atol=2e-2, rtol=2e-2)
    assert jnp.allclose(jnp.sum(action_probs, axis=-1), 1.0, atol=1e-3)
    assert action.shape == (batch,)
    assert bool(jnp.all((action >= 0) & (action < n_actions)))

    # TODO(synk): sampled actions follow the Categorical distribution via
    # Gumbel-max with JAX RNG; they don't match PyTorch's RNG stream bit-for-bit.
    print("KERNEL_OK")
</pallas_src>

<mosaic_0001>
module attributes {stable_mosaic.version = 11 : i64} {
  func.func @actor_forward_kernel(%arg0: memref<8x16xf32, #tpu.memory_space<vmem>>, %arg1: memref<16x256xbf16, #tpu.memory_space<vmem>>, %arg2: memref<256x384xbf16, #tpu.memory_space<vmem>>, %arg3: memref<1x640xf32, #tpu.memory_space<vmem>>, %arg4: memref<8x128xf32, #tpu.memory_space<vmem>>) attributes {dimension_semantics = [], scalar_prefetch = 0 : i64, scratch_operands = 0 : i64, tpu.core_type = #tpu.core_type<tc>} {
    %c0 = arith.constant 0 : index
    %c0_0 = arith.constant 0 : index
    %0 = vector.load %arg0[%c0, %c0_0] : memref<8x16xf32, #tpu.memory_space<vmem>>, vector<8x16xf32>
    %1 = arith.truncf %0 : vector<8x16xf32> to vector<8x16xbf16>
    %c0_1 = arith.constant 0 : index
    %c0_2 = arith.constant 0 : index
    %2 = vector.load %arg1[%c0_1, %c0_2] : memref<16x256xbf16, #tpu.memory_space<vmem>>, vector<16x256xbf16>
    %cst = arith.constant dense<0.000000e+00> : vector<8x256xf32>
    %3 = tpu.matmul %1, %2, %cst {dimension_numbers = #tpu.dot_dimension_numbers<[1], [0], [0], [1], [0, 0, 1, 1], [], []>} : vector<8x16xbf16>, vector<16x256xbf16>, vector<8x256xf32> -> vector<8x256xf32>
    %c0_3 = arith.constant 0 : index
    %c0_4 = arith.constant 0 : index
    %4 = vector.load %arg3[%c0_3, %c0_4] : memref<1x640xf32, #tpu.memory_space<vmem>>, vector<1x256xf32>
    %5 = vector.broadcast %4 : vector<1x256xf32> to vector<8x256xf32>
    %6 = arith.addf %3, %5 : vector<8x256xf32>
    %cst_5 = arith.constant 0.000000e+00 : f32
    %7 = vector.broadcast %cst_5 : f32 to vector<8x256xf32>
    %8 = arith.maximumf %6, %7 : vector<8x256xf32>
    %9 = arith.truncf %8 : vector<8x256xf32> to vector<8x256xbf16>
    %c0_6 = arith.constant 0 : index
    %c0_7 = arith.constant 0 : index
    %10 = vector.load %arg2[%c0_6, %c0_7] : memref<256x384xbf16, #tpu.memory_space<vmem>>, vector<256x256xbf16>
    %cst_8 = arith.constant dense<0.000000e+00> : vector<8x256xf32>
    %11 = tpu.matmul %9, %10, %cst_8 {dimension_numbers = #tpu.dot_dimension_numbers<[1], [0], [0], [1], [0, 0, 1, 1], [], []>} : vector<8x256xbf16>, vector<256x256xbf16>, vector<8x256xf32> -> vector<8x256xf32>
    %c0_9 = arith.constant 0 : index
    %c256 = arith.constant 256 : index
    %12 = vector.load %arg3[%c0_9, %c256] : memref<1x640xf32, #tpu.memory_space<vmem>>, vector<1x256xf32>
    %13 = vector.broadcast %12 : vector<1x256xf32> to vector<8x256xf32>
    %14 = arith.addf %11, %13 : vector<8x256xf32>
    %cst_10 = arith.constant 0.000000e+00 : f32
    %15 = vector.broadcast %cst_10 : f32 to vector<8x256xf32>
    %16 = arith.maximumf %14, %15 : vector<8x256xf32>
    %17 = arith.truncf %16 : vector<8x256xf32> to vector<8x256xbf16>
    %c0_11 = arith.constant 0 : index
    %c256_12 = arith.constant 256 : index
    %18 = vector.load %arg2[%c0_11, %c256_12] : memref<256x384xbf16, #tpu.memory_space<vmem>>, vector<256x128xbf16>
    %cst_13 = arith.constant dense<0.000000e+00> : vector<8x128xf32>
    %19 = tpu.matmul %17, %18, %cst_13 {dimension_numbers = #tpu.dot_dimension_numbers<[1], [0], [0], [1], [0, 0, 1, 1], [], []>} : vector<8x256xbf16>, vector<256x128xbf16>, vector<8x128xf32> -> vector<8x128xf32>
    %c0_14 = arith.constant 0 : index
    %c512 = arith.constant 512 : index
    %20 = vector.load %arg3[%c0_14, %c512] : memref<1x640xf32, #tpu.memory_space<vmem>>, vector<1x128xf32>
    %21 = vector.broadcast %20 : vector<1x128xf32> to vector<8x128xf32>
    %22 = arith.addf %19, %21 : vector<8x128xf32>
    %c0_15 = arith.constant 0 : index
    %c0_16 = arith.constant 0 : index
    %23 = vector.load %arg4[%c0_15, %c0_16] : memref<8x128xf32, #tpu.memory_space<vmem>>, vector<8x128xf32>
    tpu.vector_store %arg4[%c0_15, %c0_16], %22 {strides = array<i32>} : memref<8x128xf32, #tpu.memory_space<vmem>>, vector<8x128xf32>,
    return
  }
}

</mosaic_0001>

<llo_original>
// kernel: actor_forward.1
$region0: #{actor_forward.1}
  #allocation0 [shape = 'u32[]', space=smem, size = 0x4, offset = 0x4, fixed_abs, tag = 'smem constant byte address 0x4 - core index']
  #allocation1 [shape = 'u32[144,128]{1,0:T(1,128)}', space=vmem, size = 0x12000, scoped, tag = 'internal scratch']
  %s0 = inlined_call_operand.hbm [shape: f32[8,16], index: 0, kind: input, shape index: {}]
  %s1 = inlined_call_operand.hbm [shape: bf16[16,256], index: 1, kind: input, shape index: {}]
  %s2 = inlined_call_operand.hbm [shape: bf16[256,384], index: 2, kind: input, shape index: {}]
  %s3 = inlined_call_operand.vmem [shape: f32[1,640], index: 3, kind: input, shape index: {}]
  %s4 = inlined_call_operand.hbm [shape: f32[8,128], index: 4, kind: output, shape index: {}]
  %s5 = sld [smem:[#allocation0]]
  $region38: #{actor_forward.1} parent=0
    _
  %s7 = ssub.s32 1, %s5
  %s8 = scalar_select 0, %s7, %s5
  $region1: #{actor_forward.1} parent=0
    #allocation2 [shape = 'u8[4096]{0}', space=vmem, size = 0x1000, scoped, tag = 'input window, operand 0, single buffered']
    #allocation3 [shape = 's32[1]{0}', space=sflag, size = 0x4, scoped, tag = 'scoped memory for actor_forward.1']
    #allocation4 [shape = 's32[1]{0}', space=sflag, size = 0x4, scoped, tag = 'scoped memory for actor_forward.1']
    #allocation5 [shape = 'u8[8192]{0}', space=vmem, size = 0x2000, scoped, tag = 'input window, operand 1, single buffered']
    #allocation6 [shape = 's32[1]{0}', space=sflag, size = 0x4, scoped, tag = 'scoped memory for actor_forward.1']
    #allocation7 [shape = 'u8[196608]{0}', space=vmem, size = 0x30000, scoped, tag = 'input window, operand 2, single buffered']
    #allocation8 [shape = 'u8[4096]{0}', space=vmem, size = 0x1000, scoped, tag = 'output window, operand 0, single buffered']
    %9 = vsyncpa [#allocation3], 0
    %10 = vsyncpa [#allocation6], 0
    %11 = vsyncpa [#allocation4], 0
    // Predicated region
    $region2: #{actor_forward.1} parent=1 // pred_check
      _
    $region3: #{actor_forward.1} parent=1 // pred_check_branch
      %13 = sbr.rel (0) target = $region5
    $region4: #{actor_forward.1} parent=1 // pred_region
      %s15 = ssub.s32 128, 128
      %16 = vsyncadd [#allocation3], %s15
      %s18 = sshll.u32 [#allocation2], 4
      %s19 = int_to_ptr.vmem [resolvable:$true] %s18
      %21 = dma.hbm_to_vmem [thread:$0]  %s0, 128, %s19, [#allocation3]
    $region5: #{actor_forward.1} parent=1 // pred_fallthru
      _
    // Predicated region
    $region6: #{actor_forward.1} parent=1 // pred_check
      _
    $region7: #{actor_forward.1} parent=1 // pred_check_branch
      %23 = sbr.rel (0) target = $region9
    $region8: #{actor_forward.1} parent=1 // pred_region
      %s25 = ssub.s32 256, 256
      %26 = vsyncadd [#allocation6], %s25
      %s27 = sshll.u32 [#allocation5], 4
      %s28 = int_to_ptr.vmem [resolvable:$true] %s27
      %33 = dma.hbm_to_vmem [thread:$0]  %s1, 256, %s28, [#allocation6], 128, 128, 8
    $region9: #{actor_forward.1} parent=1 // pred_fallthru
      _
    // Predicated region
    $region10: #{actor_forward.1} parent=1 // pred_check
      _
    $region11: #{actor_forward.1} parent=1 // pred_check_branch
      %35 = sbr.rel (0) target = $region13
    $region12: #{actor_forward.1} parent=1 // pred_region
      %s37 = ssub.s32 6144, 6144
      %38 = vsyncadd [#allocation6], %s37
      %s39 = sshll.u32 [#allocation7], 4
      %s40 = int_to_ptr.vmem [resolvable:$true] %s39
      %45 = dma.hbm_to_vmem [thread:$0]  %s2, 6144, %s40, [#allocation6], 192, 192, 12
    $region13: #{actor_forward.1} parent=1 // pred_fallthru
      _
    // Predicated region
    $region14: #{actor_forward.1} parent=1 // pred_check
      _
    $region15: #{actor_forward.1} parent=1 // pred_check_branch
      %47 = sbr.rel (0) target = $region17
    $region16: #{actor_forward.1} parent=1 // pred_region
      _
    $region17: #{actor_forward.1} parent=1 // pred_fallthru
      _
    // Predicated region
    $region18: #{actor_forward.1} parent=1 // pred_check
      _
    $region19: #{actor_forward.1} parent=1 // pred_check_branch
      %49 = sbr.rel (0) target = $region21
    $region20: #{actor_forward.1} parent=1 // pred_region
      %50 = dma.done [#allocation3], 128
    $region21: #{actor_forward.1} parent=1 // pred_fallthru
      _
    // Predicated region
    $region22: #{actor_forward.1} parent=1 // pred_check
      _
    $region23: #{actor_forward.1} parent=1 // pred_check_branch
      %52 = sbr.rel (0) target = $region25
    $region24: #{actor_forward.1} parent=1 // pred_region
      %53 = dma.done [#allocation6], 256
    $region25: #{actor_forward.1} parent=1 // pred_fallthru
      _
    // Predicated region
    $region26: #{actor_forward.1} parent=1 // pred_check
      _
    $region27: #{actor_forward.1} parent=1 // pred_check_branch
      %55 = sbr.rel (0) target = $region29
    $region28: #{actor_forward.1} parent=1 // pred_region
      %56 = dma.done [#allocation6], 6144
    $region29: #{actor_forward.1} parent=1 // pred_fallthru
      _
    %v58 = vld [vmem:[#allocation2] sm:$0xff]
    %v59 = vpack.c.bf16 %v58, %v58
    %v60 = vld [vmem:[#allocation5] sm:$0xff]
    %v61 = vld [vmem:[#allocation5 + $0x8] sm:$0xff]
    %v62 = vld [vmem:[%s3] sm:$0x3]
    %v64 = vlaneseq
    %v65 = vshrl.u32 %v64, 7
    %v66 = vsub.s32 0, %v65
    %v67 = vrot.slane %v62, %v66
    %v68 = vlaneseq
    %v69 = vshrl.u32 %v68, 7
    %v70 = vsub.s32 1, %v69
    %v71 = vrot.slane %v62, %v70
    %v76 = vunpack.c.l.b16 %v60
    %v77 = vunpack.c.h.b16 %v60
    %v78 = vunpack.c.l.b16 %v61
    %v79 = vunpack.c.h.b16 %v61
    %v80 = vpack.c.b16 %v78, %v76
    %v81 = vpack.c.b16 %v79, %v77
    %vm84 = vcmask 130048
    %v86 = vsel %vm84, %v59, 0
    %88 = vmatprep.subr.bf16.mxu0 %v81
    %89 = vmatpush1.bf16.msra.mxu0 %v80
    %90 = vmatprep.subr.bf16.mxu0 0
    %91 = vmatpush1.bf16.msra.mxu0 0
    %92 = vmatprep.subr.bf16.mxu0 0
    %93 = vmatpush1.bf16.msra.mxu0 0
    %94 = vmatprep.subr.bf16.mxu0 0
    %95 = vmatpush1.bf16.msra.mxu0 0
    %96 = vmatprep.subr.bf16.mxu0 0
    %97 = vmatpush1.bf16.msra.mxu0 0
    %98 = vmatprep.subr.bf16.mxu0 0
    %99 = vmatpush1.bf16.msra.mxu0 0
    %100 = vmatprep.subr.bf16.mxu0 0
    %101 = vmatpush1.bf16.msra.mxu0 0
    %102 = vmatprep.subr.bf16.mxu0 0
    %103 = vmatpush1.bf16.msra.mxu0 0
    %104 = vmatprep.subr.bf16.mxu0 0
    %105 = vmatpush1.bf16.msra.mxu0 0
    %106 = vmatprep.subr.bf16.mxu0 0
    %107 = vmatpush1.bf16.msra.mxu0 0
    %108 = vmatprep.subr.bf16.mxu0 0
    %109 = vmatpush1.bf16.msra.mxu0 0
    %110 = vmatprep.subr.bf16.mxu0 0
    %111 = vmatpush1.bf16.msra.mxu0 0
    %112 = vmatprep.subr.bf16.mxu0 0
    %113 = vmatpush1.bf16.msra.mxu0 0
    %114 = vmatprep.subr.bf16.mxu0 0
    %115 = vmatpush1.bf16.msra.mxu0 0
    %116 = vmatprep.subr.bf16.mxu0 0
    %117 = vmatpush1.bf16.msra.mxu0 0
    %118 = vmatprep.subr.bf16.mxu0 0
    %119 = vmatpush1.bf16.msra.mxu0 0
    %120 = vmatprep.mubr.bf16.mxu0 0
    %121 = vmatmul.mubr.bf16.gmra.mrb[0].mxu0 %v86
    %v122 = vpop.f32.mrb[0].mxu0
    %v123 = vadd.f32 %v67, %v122
    %v124 = vpop.f32.mrb[0].mxu0
    %v125 = vadd.f32 %v71, %v124
    %v126 = vpop.f32.mrb[0].mxu0
    %v127 = vpop.f32.mrb[0].mxu0
    %128 = vdwg.mxu0
    %v129 = vmax.f32 %v123, 0.0
    %v130 = vmax.f32 %v125, 0.0
    %v131 = vpack.c.bf16 %v129, %v129
    %v132 = vpack.c.bf16 %v130, %v130
    %v133 = vld [vmem:[#allocation7] sm:$0xff]
    %v134 = vld [vmem:[#allocation7 + $0xc] sm:$0xff]
    %v135 = vld [vmem:[#allocation7 + $0x18] sm:$0xff]
    %v136 = vld [vmem:[#allocation7 + $0x24] sm:$0xff]
    %v137 = vld [vmem:[#allocation7 + $0x30] sm:$0xff]
    %v138 = vld [vmem:[#allocation7 + $0x3c] sm:$0xff]
    %v139 = vld [vmem:[#allocation7 + $0x48] sm:$0xff]
    %v140 = vld [vmem:[#allocation7 + $0x54] sm:$0xff]
    %v141 = vld [vmem:[#allocation7 + $0x60] sm:$0xff]
    %v142 = vld [vmem:[#allocation7 + $0x6c] sm:$0xff]
    %v143 = vld [vmem:[#allocation7 + $0x78] sm:$0xff]
    %v144 = vld [vmem:[#allocation7 + $0x84] sm:$0xff]
    %v145 = vld [vmem:[#allocation7 + $0x90] sm:$0xff]
    %v146 = vld [vmem:[#allocation7 + $0x9c] sm:$0xff]
    %v147 = vld [vmem:[#allocation7 + $0xa8] sm:$0xff]
    %v148 = vld [vmem:[#allocation7 + $0xb4] sm:$0xff]
    %v149 = vld [vmem:[#allocation7 + $0xc0] sm:$0xff]
    %v150 = vld [vmem:[#allocation7 + $0xcc] sm:$0xff]
    %v151 = vld [vmem:[#allocation7 + $0xd8] sm:$0xff]
    %v152 = vld [vmem:[#allocation7 + $0xe4] sm:$0xff]
    %v153 = vld [vmem:[#allocation7 + $0xf0] sm:$0xff]
    %v154 = vld [vmem:[#allocation7 + $0xfc] sm:$0xff]
    %v155 = vld [vmem:[#allocation7 + $0x108] sm:$0xff]
    %v156 = vld [vmem:[#allocation7 + $0x114] sm:$0xff]
    %v157 = vld [vmem:[#allocation7 + $0x120] sm:$0xff]
    %v158 = vld [vmem:[#allocation7 + $0x12c] sm:$0xff]
    %v159 = vld [vmem:[#allocation7 + $0x138] sm:$0xff]
    %v160 = vld [vmem:[#allocation7 + $0x144] sm:$0xff]
    %v161 = vld [vmem:[#allocation7 + $0x150] sm:$0xff]
    %v162 = vld [vmem:[#allocation7 + $0x15c] sm:$0xff]
    %v163 = vld [vmem:[#allocation7 + $0x168] sm:$0xff]
    %v164 = vld [vmem:[#allocation7 + $0x174] sm:$0xff]
    %v165 = vld [vmem:[%s3 + $0x2] sm:$0x3]
    %v167 = vlaneseq
    %v168 = vshrl.u32 %v167, 7
    %v169 = vsub.s32 0, %v168
    %v170 = vrot.slane %v165, %v169
    %v171 = vlaneseq
    %v172 = vshrl.u32 %v171, 7
    %v173 = vsub.s32 1, %v172
    %v174 = vrot.slane %v165, %v173
    %v209 = vunpack.c.l.b16 %v133
    %v210 = vunpack.c.h.b16 %v133
    %v211 = vunpack.c.l.b16 %v134
    %v212 = vunpack.c.h.b16 %v134
    %v213 = vunpack.c.l.b16 %v135
    %v214 = vunpack.c.h.b16 %v135
    %v215 = vunpack.c.l.b16 %v136
    %v216 = vunpack.c.h.b16 %v136
    %v217 = vunpack.c.l.b16 %v137
    %v218 = vunpack.c.h.b16 %v137
    %v219 = vunpack.c.l.b16 %v138
    %v220 = vunpack.c.h.b16 %v138
    %v221 = vunpack.c.l.b16 %v139
    %v222 = vunpack.c.h.b16 %v139
    %v223 = vunpack.c.l.b16 %v140
    %v224 = vunpack.c.h.b16 %v140
    %v225 = vunpack.c.l.b16 %v141
    %v226 = vunpack.c.h.b16 %v141
    %v227 = vunpack.c.l.b16 %v142
    %v228 = vunpack.c.h.b16 %v142
    %v229 = vunpack.c.l.b16 %v143
    %v230 = vunpack.c.h.b16 %v143
    %v231 = vunpack.c.l.b16 %v144
    %v232 = vunpack.c.h.b16 %v144
    %v233 = vunpack.c.l.b16 %v145
    %v234 = vunpack.c.h.b16 %v145
    %v235 = vunpack.c.l.b16 %v146
    %v236 = vunpack.c.h.b16 %v146
    %v237 = vunpack.c.l.b16 %v147
    %v238 = vunpack.c.h.b16 %v147
    %v239 = vunpack.c.l.b16 %v148
    %v240 = vunpack.c.h.b16 %v148
    %v241 = vunpack.c.l.b16 %v149
    %v242 = vunpack.c.h.b16 %v149
    %v243 = vunpack.c.l.b16 %v150
    %v244 = vunpack.c.h.b16 %v150
    %v245 = vunpack.c.l.b16 %v151
    %v246 = vunpack.c.h.b16 %v151
    %v247 = vunpack.c.l.b16 %v152
    %v248 = vunpack.c.h.b16 %v152
    %v249 = vunpack.c.l.b16 %v153
    %v250 = vunpack.c.h.b16 %v153
    %v251 = vunpack.c.l.b16 %v154
    %v252 = vunpack.c.h.b16 %v154
    %v253 = vunpack.c.l.b16 %v155
    %v254 = vunpack.c.h.b16 %v155
    %v255 = vunpack.c.l.b16 %v156
    %v256 = vunpack.c.h.b16 %v156
    %v257 = vunpack.c.l.b16 %v157
    %v258 = vunpack.c.h.b16 %v157
    %v259 = vunpack.c.l.b16 %v158
    %v260 = vunpack.c.h.b16 %v158
    %v261 = vunpack.c.l.b16 %v159
    %v262 = vunpack.c.h.b16 %v159
    %v263 = vunpack.c.l.b16 %v160
    %v264 = vunpack.c.h.b16 %v160
    %v265 = vunpack.c.l.b16 %v161
    %v266 = vunpack.c.h.b16 %v161
    %v267 = vunpack.c.l.b16 %v162
    %v268 = vunpack.c.h.b16 %v162
    %v269 = vunpack.c.l.b16 %v163
    %v270 = vunpack.c.h.b16 %v163
    %v271 = vunpack.c.l.b16 %v164
    %v272 = vunpack.c.h.b16 %v164
    %v273 = vpack.c.b16 %v211, %v209
    %v274 = vpack.c.b16 %v212, %v210
    %v275 = vpack.c.b16 %v215, %v213
    %v276 = vpack.c.b16 %v216, %v214
    %v277 = vpack.c.b16 %v219, %v217
    %v278 = vpack.c.b16 %v220, %v218
    %v279 = vpack.c.b16 %v223, %v221
    %v280 = vpack.c.b16 %v224, %v222
    %v281 = vpack.c.b16 %v227, %v225
    %v282 = vpack.c.b16 %v228, %v226
    %v283 = vpack.c.b16 %v231, %v229
    %v284 = vpack.c.b16 %v232, %v230
    %v285 = vpack.c.b16 %v235, %v233
    %v286 = vpack.c.b16 %v236, %v234
    %v287 = vpack.c.b16 %v239, %v237
    %v288 = vpack.c.b16 %v240, %v238
    %v289 = vpack.c.b16 %v243, %v241
    %v290 = vpack.c.b16 %v244, %v242
    %v291 = vpack.c.b16 %v247, %v245
    %v292 = vpack.c.b16 %v248, %v246
    %v293 = vpack.c.b16 %v251, %v249
    %v294 = vpack.c.b16 %v252, %v250
    %v295 = vpack.c.b16 %v255, %v253
    %v296 = vpack.c.b16 %v256, %v254
    %v297 = vpack.c.b16 %v259, %v257
    %v298 = vpack.c.b16 %v260, %v258
    %v299 = vpack.c.b16 %v263, %v261
    %v300 = vpack.c.b16 %v264, %v262
    %v301 = vpack.c.b16 %v267, %v265
    %v302 = vpack.c.b16 %v268, %v266
    %v303 = vpack.c.b16 %v271, %v269
    %v304 = vpack.c.b16 %v272, %v270
    %337 = vmatprep.subr.bf16.mxu0 %v274
    %338 = vmatpush1.bf16.msra.mxu0 %v273
    %339 = vmatprep.subr.bf16.mxu0 %v276
    %340 = vmatpush1.bf16.msra.mxu0 %v275
    %341 = vmatprep.subr.bf16.mxu0 %v278
    %342 = vmatpush1.bf16.msra.mxu0 %v277
    %343 = vmatprep.subr.bf16.mxu0 %v280
    %344 = vmatpush1.bf16.msra.mxu0 %v279
    %345 = vmatprep.subr.bf16.mxu0 %v282
    %346 = vmatpush1.bf16.msra.mxu0 %v281
    %347 = vmatprep.subr.bf16.mxu0 %v284
    %348 = vmatpush1.bf16.msra.mxu0 %v283
    %349 = vmatprep.subr.bf16.mxu0 %v286
    %350 = vmatpush1.bf16.msra.mxu0 %v285
    %351 = vmatprep.subr.bf16.mxu0 %v288
    %352 = vmatpush1.bf16.msra.mxu0 %v287
    %353 = vmatprep.subr.bf16.mxu0 %v290
    %354 = vmatpush1.bf16.msra.mxu0 %v289
    %355 = vmatprep.subr.bf16.mxu0 %v292
    %356 = vmatpush1.bf16.msra.mxu0 %v291
    %357 = vmatprep.subr.bf16.mxu0 %v294
    %358 = vmatpush1.bf16.msra.mxu0 %v293
    %359 = vmatprep.subr.bf16.mxu0 %v296
    %360 = vmatpush1.bf16.msra.mxu0 %v295
    %361 = vmatprep.subr.bf16.mxu0 %v298
    %362 = vmatpush1.bf16.msra.mxu0 %v297
    %363 = vmatprep.subr.bf16.mxu0 %v300
    %364 = vmatpush1.bf16.msra.mxu0 %v299
    %365 = vmatprep.subr.bf16.mxu0 %v302
    %366 = vmatpush1.bf16.msra.mxu0 %v301
    %367 = vmatprep.subr.bf16.mxu0 %v304
    %368 = vmatpush1.bf16.msra.mxu0 %v303
    %369 = vmatprep.mubr.bf16.mxu0 %v132
    %370 = vmatmul.mubr.bf16.gmra.mrb[0].mxu0 %v131
    %v371 = vpop.f32.mrb[0].mxu0
    %v372 = vadd.f32 %v170, %v371
    %v373 = vpop.f32.mrb[0].mxu0
    %v374 = vadd.f32 %v174, %v373
    %v375 = vpop.f32.mrb[0].mxu0
    %v376 = vpop.f32.mrb[0].mxu0
    %377 = vdwg.mxu0
    %v378 = vmax.f32 %v372, 0.0
    %v379 = vmax.f32 %v374, 0.0
    %v380 = vpack.c.bf16 %v378, %v378
    %v381 = vpack.c.bf16 %v379, %v379
    %v382 = vld [vmem:[#allocation7 + $0x8] sm:$0xf]
    %v383 = vld [vmem:[#allocation7 + $0x14] sm:$0xf]
    %v384 = vld [vmem:[#allocation7 + $0x20] sm:$0xf]
    %v385 = vld [vmem:[#allocation7 + $0x2c] sm:$0xf]
    %v386 = vld [vmem:[#allocation7 + $0x38] sm:$0xf]
    %v387 = vld [vmem:[#allocation7 + $0x44] sm:$0xf]
    %v388 = vld [vmem:[#allocation7 + $0x50] sm:$0xf]
    %v389 = vld [vmem:[#allocation7 + $0x5c] sm:$0xf]
    %v390 = vld [vmem:[#allocation7 + $0x68] sm:$0xf]
    %v391 = vld [vmem:[#allocation7 + $0x74] sm:$0xf]
    %v392 = vld [vmem:[#allocation7 + $0x80] sm:$0xf]
    %v393 = vld [vmem:[#allocation7 + $0x8c] sm:$0xf]
    %v394 = vld [vmem:[#allocation7 + $0x98] sm:$0xf]
    %v395 = vld [vmem:[#allocation7 + $0xa4] sm:$0xf]
    %v396 = vld [vmem:[#allocation7 + $0xb0] sm:$0xf]
    %v397 = vld [vmem:[#allocation7 + $0xbc] sm:$0xf]
    %v398 = vld [vmem:[#allocation7 + $0xc8] sm:$0xf]
    %v399 = vld [vmem:[#allocation7 + $0xd4] sm:$0xf]
    %v400 = vld [vmem:[#allocation7 + $0xe0] sm:$0xf]
    %v401 = vld [vmem:[#allocation7 + $0xec] sm:$0xf]
    %v402 = vld [vmem:[#allocation7 + $0xf8] sm:$0xf]
    %v403 = vld [vmem:[#allocation7 + $0x104] sm:$0xf]
    %v404 = vld [vmem:[#allocation7 + $0x110] sm:$0xf]
    %v405 = vld [vmem:[#allocation7 + $0x11c] sm:$0xf]
    %v406 = vld [vmem:[#allocation7 + $0x128] sm:$0xf]
    %v407 = vld [vmem:[#allocation7 + $0x134] sm:$0xf]
    %v408 = vld [vmem:[#allocation7 + $0x140] sm:$0xf]
    %v409 = vld [vmem:[#allocation7 + $0x14c] sm:$0xf]
    %v410 = vld [vmem:[#allocation7 + $0x158] sm:$0xf]
    %v411 = vld [vmem:[#allocation7 + $0x164] sm:$0xf]
    %v412 = vld [vmem:[#allocation7 + $0x170] sm:$0xf]
    %v413 = vld [vmem:[#allocation7 + $0x17c] sm:$0xf]
    %v414 = vld [vmem:[%s3 + $0x4] sm:$0x1]
    %v416 = vlaneseq
    %v417 = vshrl.u32 %v416, 7
    %v418 = vsub.s32 0, %v417
    %v419 = vrot.slane %v414, %v418
    %v453 = vunpack.c.l.b16 %v382
    %v454 = vunpack.c.l.b16 %v383
    %v455 = vunpack.c.l.b16 %v384
    %v456 = vunpack.c.l.b16 %v385
    %v457 = vunpack.c.l.b16 %v386
    %v458 = vunpack.c.l.b16 %v387
    %v459 = vunpack.c.l.b16 %v388
    %v460 = vunpack.c.l.b16 %v389
    %v461 = vunpack.c.l.b16 %v390
    %v462 = vunpack.c.l.b16 %v391
    %v463 = vunpack.c.l.b16 %v392
    %v464 = vunpack.c.l.b16 %v393
    %v465 = vunpack.c.l.b16 %v394
    %v466 = vunpack.c.l.b16 %v395
    %v467 = vunpack.c.l.b16 %v396
    %v468 = vunpack.c.l.b16 %v397
    %v469 = vunpack.c.l.b16 %v398
    %v470 = vunpack.c.l.b16 %v399
    %v471 = vunpack.c.l.b16 %v400
    %v472 = vunpack.c.l.b16 %v401
    %v473 = vunpack.c.l.b16 %v402
    %v474 = vunpack.c.l.b16 %v403
    %v475 = vunpack.c.l.b16 %v404
    %v476 = vunpack.c.l.b16 %v405
    %v477 = vunpack.c.l.b16 %v406
    %v478 = vunpack.c.l.b16 %v407
    %v479 = vunpack.c.l.b16 %v408
    %v480 = vunpack.c.l.b16 %v409
    %v481 = vunpack.c.l.b16 %v410
    %v482 = vunpack.c.l.b16 %v411
    %v483 = vunpack.c.l.b16 %v412
    %v484 = vunpack.c.l.b16 %v413
    %v485 = vpack.c.b16 %v454, %v453
    %v486 = vpack.c.b16 %v456, %v455
    %v487 = vpack.c.b16 %v458, %v457
    %v488 = vpack.c.b16 %v460, %v459
    %v489 = vpack.c.b16 %v462, %v461
    %v490 = vpack.c.b16 %v464, %v463
    %v491 = vpack.c.b16 %v466, %v465
    %v492 = vpack.c.b16 %v468, %v467
    %v493 = vpack.c.b16 %v470, %v469
    %v494 = vpack.c.b16 %v472, %v471
    %v495 = vpack.c.b16 %v474, %v473
    %v496 = vpack.c.b16 %v476, %v475
    %v497 = vpack.c.b16 %v478, %v477
    %v498 = vpack.c.b16 %v480, %v479
    %v499 = vpack.c.b16 %v482, %v481
    %v500 = vpack.c.b16 %v484, %v483
    %517 = vmatprep.subr.bf16.mxu0 0
    %518 = vmatpush1.bf16.msra.mxu0 %v485
    %519 = vmatprep.subr.bf16.mxu0 0
    %520 = vmatpush1.bf16.msra.mxu0 %v486
    %521 = vmatprep.subr.bf16.mxu0 0
    %522 = vmatpush1.bf16.msra.mxu0 %v487
    %523 = vmatprep.subr.bf16.mxu0 0
    %524 = vmatpush1.bf16.msra.mxu0 %v488
    %525 = vmatprep.subr.bf16.mxu0 0
    %526 = vmatpush1.bf16.msra.mxu0 %v489
    %527 = vmatprep.subr.bf16.mxu0 0
    %528 = vmatpush1.bf16.msra.mxu0 %v490
    %529 = vmatprep.subr.bf16.mxu0 0
    %530 = vmatpush1.bf16.msra.mxu0 %v491
    %531 = vmatprep.subr.bf16.mxu0 0
    %532 = vmatpush1.bf16.msra.mxu0 %v492
    %533 = vmatprep.subr.bf16.mxu0 0
    %534 = vmatpush1.bf16.msra.mxu0 %v493
    %535 = vmatprep.subr.bf16.mxu0 0
    %536 = vmatpush1.bf16.msra.mxu0 %v494
    %537 = vmatprep.subr.bf16.mxu0 0
    %538 = vmatpush1.bf16.msra.mxu0 %v495
    %539 = vmatprep.subr.bf16.mxu0 0
    %540 = vmatpush1.bf16.msra.mxu0 %v496
    %541 = vmatprep.subr.bf16.mxu0 0
    %542 = vmatpush1.bf16.msra.mxu0 %v497
    %543 = vmatprep.subr.bf16.mxu0 0
    %544 = vmatpush1.bf16.msra.mxu0 %v498
    %545 = vmatprep.subr.bf16.mxu0 0
    %546 = vmatpush1.bf16.msra.mxu0 %v499
    %547 = vmatprep.subr.bf16.mxu0 0
    %548 = vmatpush1.bf16.msra.mxu0 %v500
    %549 = vmatprep.mubr.bf16.mxu0 %v381
    %550 = vmatmul.mubr.bf16.gmra.mrb[0].mxu0 %v380
    %v551 = vpop.f32.mrb[0].mxu0
    %v552 = vadd.f32 %v419, %v551
    %v553 = vpop.f32.mrb[0].mxu0
    %v554 = vpop.f32.mrb[0].mxu0
    %v555 = vpop.f32.mrb[0].mxu0
    %556 = vdwg.mxu0
    %557 = vst [vmem:[#allocation8] sm:$0xff] %v552
    // Predicated region
    $region30: #{actor_forward.1} parent=1 // pred_check
      _
    $region31: #{actor_forward.1} parent=1 // pred_check_branch
      %559 = sbr.rel (0) target = $region33
    $region32: #{actor_forward.1} parent=1 // pred_region
      %s561 = ssub.s32 128, 128
      %562 = vsyncadd [#allocation4], %s561
      %s564 = sshll.u32 [#allocation8], 4
      %s565 = int_to_ptr.vmem [resolvable:$true] %s564
      %567 = dma.vmem_to_hbm [thread:$0]  %s565, 128, %s4, [#allocation4]
    $region33: #{actor_forward.1} parent=1 // pred_fallthru
      _
    // Predicated region
    $region34: #{actor_forward.1} parent=1 // pred_check
      _
    $region35: #{actor_forward.1} parent=1 // pred_check_branch
      %569 = sbr.rel (0) target = $region37
    $region36: #{actor_forward.1} parent=1 // pred_region
      %570 = dma.done [#allocation4], 128
    $region37: #{actor_forward.1} parent=1 // pred_fallthru
      _
    %571 = vsyncpa [#allocation3], 1
    %572 = vsyncpa [#allocation6], 1
    %573 = vsyncpa [#allocation4], 1

</llo_original>
